<compile_context>
chip_gen: v7x
topology: tpu7x:2x2x1
jax: 0.10.0
libtpu: 0.0.40
codegen_flags: <defaults>
</compile_context>

<pallas_src>
import functools

import jax
import jax.numpy as jnp
from jax.experimental import pallas as pl
from jax.experimental.pallas import tpu as pltpu

_LANE = 128        # lane width (last-dim granularity)
_MAX_M_TILE = 512  # measured: ~85% of HBM roofline at tile 512 vs ~29% at 128


def _round_up(v, m):
    return (v + m - 1) // m * m


def _sublane(dtype):
    # f32 -> 8 rows per vreg sublane tile, bf16 -> 16 (packed sublanes).
    return 8 * (4 // jnp.dtype(dtype).itemsize)


def _mlp_fused_kernel(num_layers, x_ref, *refs):
    """y = relu(...relu(relu(x@W1+b1)@W2+b2)...) on one M-tile, all layers fused.

    refs = (w1, b1, ..., wL, bL, out_ref). Weight N dims are lane-dense
    (padded to 128); biases are kept in f32 so the epilogue runs on the f32
    accumulator (VPU-safe on v5e, exact on all chips).
    """
    out_ref = refs[-1]
    wb = refs[:-1]

    y = x_ref[...]
    for l in range(num_layers):
        w = wb[2 * l][...]
        b = wb[2 * l + 1][...]                                     # f32 bias
        acc = jnp.dot(y, w, preferred_element_type=jnp.float32)    # MXU, f32 acc
        y = jnp.maximum(acc + b, 0.0)                              # bias+ReLU epilogue (f32)
        if l < num_layers - 1:
            y = y.astype(w.dtype)   # back to compute dtype (bf16) for next MXU pass; no-op for f32
    out_ref[...] = y.astype(out_ref.dtype)


def _prepare_params(params, compute_dtype):
    """Pad ONCE (outside the per-call path) to lane-dense shapes and cast weights."""
    dims = [params[0][0].shape[0]] + [w.shape[1] for (w, _) in params]
    # Layer-output widths padded to the lane width; the input feature dim is
    # left as-is (it rides as a full-extent block dim of x and of W1's K axis).
    pdims = [dims[0]] + [_round_up(d, _LANE) for d in dims[1:]]
    padded = []
    for l, (w, b) in enumerate(params):
        K, N = w.shape
        Kp, Np = pdims[l], pdims[l + 1]
        wp = jnp.zeros((Kp, Np), compute_dtype).at[:K, :N].set(w.astype(compute_dtype))
        bp = jnp.zeros((1, Np), jnp.float32).at[:, :N].set(b.astype(jnp.float32))
        padded.append((wp, bp))
    return padded, tuple(dims), tuple(pdims)


def _choose_m_tiling(M, sub):
    Mp = _round_up(M, sub)
    if Mp <= 2 * sub:
        tm = Mp                                   # tiny batch: one tile
    elif Mp <= _MAX_M_TILE:
        tm = _round_up(-(-Mp // 2), sub)          # 2 tiles -> both v7x TCs get work
    else:
        tm = _MAX_M_TILE                          # big batch: big tiles amortize step overhead
    return _round_up(Mp, tm), tm


def _mlp_forward(padded_params, x, *, dims, pdims):
    num_layers = len(padded_params)
    cdtype = padded_params[0][0].dtype
    M, D0 = x.shape
    assert D0 == dims[0], (D0, dims)

    x = x.astype(cdtype)
    sub = _sublane(cdtype)
    Mp, tm = _choose_m_tiling(M, sub)
    if Mp != M:
        # Pad rows only; feature dims stay at full extent (no lane padding of x).
        x = jnp.zeros((Mp, D0), cdtype).at[:M].set(x)

    wb_flat, wb_specs = [], []
    for wp, bp in padded_params:
        # Constant index_map -> single-buffer: halves the weight VMEM footprint.
        wb_specs.append(pl.BlockSpec(wp.shape, lambda i: (0, 0),
                                     pipeline_mode=pl.Buffered(1)))
        wb_specs.append(pl.BlockSpec(bp.shape, lambda i: (0, 0),
                                     pipeline_mode=pl.Buffered(1)))
        wb_flat += [wp, bp]

    in_specs = [pl.BlockSpec((tm, D0), lambda i: (i, 0))] + wb_specs
    out_specs = pl.BlockSpec((tm, pdims[-1]), lambda i: (i, 0))

    # VMEM budget: single-buffered resident weights + double-buffered x/out
    # tiles + f32 activation headroom; capped at 64 MiB so it is valid on v7x.
    itemsize = jnp.dtype(cdtype).itemsize
    weight_bytes = sum(w.size * w.dtype.itemsize + b.size * b.dtype.itemsize
                       for w, b in padded_params)
    io_bytes = 2 * tm * (D0 + pdims[-1]) * itemsize
    act_bytes = 2 * tm * max(pdims) * 4
    needed = weight_bytes + io_bytes + act_bytes
    vmem_limit = int(min(max(2 * needed + (4 << 20), 32 << 20), 64 << 20))
    # TODO(synk): if weight_bytes approaches the VMEM budget (notably v7x's
    # 64 MiB), stream weight slices (pltpu.emit_pipeline / K-reduction grid
    # axis with a pl.when-initialized accumulator) instead of keeping every
    # layer resident.

    flops = 2 * Mp * sum(w.shape[0] * w.shape[1] for w, _ in padded_params)
    bytes_accessed = (Mp * D0 + Mp * pdims[-1]) * itemsize + weight_bytes

    out = pl.pallas_call(
        functools.partial(_mlp_fused_kernel, num_layers),
        out_shape=jax.ShapeDtypeStruct((Mp, pdims[-1]), cdtype),
        grid=(Mp // tm,),
        in_specs=in_specs,
        out_specs=out_specs,
        compiler_params=pltpu.CompilerParams(
            dimension_semantics=("parallel",),   # batch tiles are independent
            vmem_limit_bytes=vmem_limit,
        ),
        cost_estimate=pl.CostEstimate(
            flops=flops, transcendentals=0, bytes_accessed=bytes_accessed),
    )(x, *wb_flat)

    if Mp == M and pdims[-1] == dims[-1]:
        return out
    return out[:M, :dims[-1]]


def build_mlp(params, compute_dtype=jnp.float32):
    """Pad/cast params once; return (padded_params, jitted forward fn)."""
    padded, dims, pdims = _prepare_params(params, compute_dtype)
    fwd = jax.jit(functools.partial(_mlp_forward, dims=dims, pdims=pdims))
    return padded, fwd


def init_mlp_params(key, feat_dim, fc_dims):
    """Parameter init matching nn.Linear shapes.

    PyTorch Linear weight is (out, in); we store the transpose (in, out).
    Weights: xavier_uniform_ (same bound either orientation).
    Biases:  uniform(-1/sqrt(fan_in), 1/sqrt(fan_in)) like PyTorch's default.
    """
    layer_dims = [feat_dim] + list(fc_dims)
    params = []
    for i in range(len(layer_dims) - 1):
        fan_in, fan_out = layer_dims[i], layer_dims[i + 1]
        key, kw, kb = jax.random.split(key, 3)
        limit = (6.0 / (fan_in + fan_out)) ** 0.5
        w = jax.random.uniform(kw, (fan_in, fan_out), jnp.float32, -limit, limit)
        bb = 1.0 / (fan_in ** 0.5)
        b = jax.random.uniform(kb, (1, fan_out), jnp.float32, -bb, bb)
        params.append((w, b))
    return params


if __name__ == "__main__":
    key = jax.random.PRNGKey(0)

    batch = 8
    feat_dim = 32
    fc_dims = [64, 32]

    key, kx = jax.random.split(key)
    x = jax.random.normal(kx, (batch, feat_dim), jnp.float32)
    params = init_mlp_params(key, feat_dim, fc_dims)

    # Pure-JAX reference.
    ref = x
    for w, b in params:
        ref = jnp.maximum(ref @ w + b, 0.0)

    # f32 compute path (exact check).
    padded32, fwd32 = build_mlp(params, jnp.float32)
    out32 = jax.block_until_ready(fwd32(padded32, x))
    assert out32.shape == (batch, fc_dims[-1])
    assert jnp.allclose(out32, ref, atol=1e-5, rtol=1e-5)

    # bf16 compute path (v6e/v7x MXU bf16 peak, half the weight VMEM/HBM;
    # f32 accumulation + f32 bias/ReLU epilogue keep the math well-behaved).
    padded16, fwd16 = build_mlp(params, jnp.bfloat16)
    out16 = jax.block_until_ready(fwd16(padded16, x))
    assert out16.shape == (batch, fc_dims[-1])
    assert jnp.allclose(out16.astype(jnp.float32), ref, atol=1e-1, rtol=1e-1)

    print("KERNEL_OK")
</pallas_src>

<mosaic_0001>
module attributes {stable_mosaic.version = 11 : i64} {
  func.func @_mlp_fused_kernel(%arg0: i32, %arg1: memref<8x32xf32, #tpu.memory_space<vmem>>, %arg2: memref<32x128xf32, #tpu.memory_space<vmem>>, %arg3: memref<1x128xf32, #tpu.memory_space<vmem>>, %arg4: memref<128x128xf32, #tpu.memory_space<vmem>>, %arg5: memref<1x128xf32, #tpu.memory_space<vmem>>, %arg6: memref<8x128xf32, #tpu.memory_space<vmem>>) attributes {dimension_semantics = [#tpu.dimension_semantics<parallel>], iteration_bounds = array<i64: 1>, scalar_prefetch = 0 : i64, scratch_operands = 0 : i64, tpu.core_type = #tpu.core_type<tc>, window_params = [{transform_indices = @transform_0, window_bounds = array<i64: 8, 32>}, {pipeline_mode = #tpu.pipeline_mode<synchronous>, transform_indices = @transform_1, window_bounds = array<i64: 32, 128>}, {pipeline_mode = #tpu.pipeline_mode<synchronous>, transform_indices = @transform_2, window_bounds = array<i64: 1, 128>}, {pipeline_mode = #tpu.pipeline_mode<synchronous>, transform_indices = @transform_3, window_bounds = array<i64: 128, 128>}, {pipeline_mode = #tpu.pipeline_mode<synchronous>, transform_indices = @transform_4, window_bounds = array<i64: 1, 128>}, {transform_indices = @transform_5, window_bounds = array<i64: 8, 128>}]} {
    %c0 = arith.constant 0 : index
    %c0_0 = arith.constant 0 : index
    %0 = vector.load %arg1[%c0, %c0_0] : memref<8x32xf32, #tpu.memory_space<vmem>>, vector<8x32xf32>
    %c0_1 = arith.constant 0 : index
    %c0_2 = arith.constant 0 : index
    %1 = vector.load %arg2[%c0_1, %c0_2] : memref<32x128xf32, #tpu.memory_space<vmem>>, vector<32x128xf32>
    %c0_3 = arith.constant 0 : index
    %c0_4 = arith.constant 0 : index
    %2 = vector.load %arg3[%c0_3, %c0_4] : memref<1x128xf32, #tpu.memory_space<vmem>>, vector<1x128xf32>
    %cst = arith.constant dense<0.000000e+00> : vector<8x128xf32>
    %3 = tpu.matmul %0, %1, %cst {dimension_numbers = #tpu.dot_dimension_numbers<[1], [0], [0], [1], [0, 0, 1, 1], [], []>} : vector<8x32xf32>, vector<32x128xf32>, vector<8x128xf32> -> vector<8x128xf32>
    %4 = vector.broadcast %2 : vector<1x128xf32> to vector<8x128xf32>
    %5 = arith.addf %3, %4 : vector<8x128xf32>
    %cst_5 = arith.constant 0.000000e+00 : f32
    %6 = vector.broadcast %cst_5 : f32 to vector<8x128xf32>
    %7 = arith.maximumf %5, %6 : vector<8x128xf32>
    %c0_6 = arith.constant 0 : index
    %c0_7 = arith.constant 0 : index
    %8 = vector.load %arg4[%c0_6, %c0_7] : memref<128x128xf32, #tpu.memory_space<vmem>>, vector<128x128xf32>
    %c0_8 = arith.constant 0 : index
    %c0_9 = arith.constant 0 : index
    %9 = vector.load %arg5[%c0_8, %c0_9] : memref<1x128xf32, #tpu.memory_space<vmem>>, vector<1x128xf32>
    %cst_10 = arith.constant dense<0.000000e+00> : vector<8x128xf32>
    %10 = tpu.matmul %7, %8, %cst_10 {dimension_numbers = #tpu.dot_dimension_numbers<[1], [0], [0], [1], [0, 0, 1, 1], [], []>} : vector<8x128xf32>, vector<128x128xf32>, vector<8x128xf32> -> vector<8x128xf32>
    %11 = vector.broadcast %9 : vector<1x128xf32> to vector<8x128xf32>
    %12 = arith.addf %10, %11 : vector<8x128xf32>
    %cst_11 = arith.constant 0.000000e+00 : f32
    %13 = vector.broadcast %cst_11 : f32 to vector<8x128xf32>
    %14 = arith.maximumf %12, %13 : vector<8x128xf32>
    %c0_12 = arith.constant 0 : index
    %c0_13 = arith.constant 0 : index
    %15 = vector.load %arg6[%c0_12, %c0_13] : memref<8x128xf32, #tpu.memory_space<vmem>>, vector<8x128xf32>
    tpu.vector_store %arg6[%c0_12, %c0_13], %14 {strides = array<i32>} : memref<8x128xf32, #tpu.memory_space<vmem>>, vector<8x128xf32>,
    return
  }
  func.func @transform_0(%arg0: i32) -> (i32, i32) {
    %c0_i32 = arith.constant 0 : i32
    %c0_i32_0 = arith.constant 0 : i32
    return %arg0, %c0_i32 : i32, i32
  }
  func.func @transform_1(%arg0: i32) -> (i32, i32) {
    %c0_i32 = arith.constant 0 : i32
    %c0_i32_0 = arith.constant 0 : i32
    %c0_i32_1 = arith.constant 0 : i32
    return %c0_i32, %c0_i32_0 : i32, i32
  }
  func.func @transform_2(%arg0: i32) -> (i32, i32) {
    %c0_i32 = arith.constant 0 : i32
    %c0_i32_0 = arith.constant 0 : i32
    %c0_i32_1 = arith.constant 0 : i32
    return %c0_i32, %c0_i32_0 : i32, i32
  }
  func.func @transform_3(%arg0: i32) -> (i32, i32) {
    %c0_i32 = arith.constant 0 : i32
    %c0_i32_0 = arith.constant 0 : i32
    %c0_i32_1 = arith.constant 0 : i32
    return %c0_i32, %c0_i32_0 : i32, i32
  }
  func.func @transform_4(%arg0: i32) -> (i32, i32) {
    %c0_i32 = arith.constant 0 : i32
    %c0_i32_0 = arith.constant 0 : i32
    %c0_i32_1 = arith.constant 0 : i32
    return %c0_i32, %c0_i32_0 : i32, i32
  }
  func.func @transform_5(%arg0: i32) -> (i32, i32) {
    %c0_i32 = arith.constant 0 : i32
    %c0_i32_0 = arith.constant 0 : i32
    return %arg0, %c0_i32 : i32, i32
  }
}

</mosaic_0001>

<llo_original>
// kernel: _mlp_forward.1
$region0: #{_mlp_forward.1}
  #allocation0 [shape = 'u32[]', space=smem, size = 0x4, offset = 0x4, fixed_abs, tag = 'smem constant byte address 0x4 - core index']
  #allocation1 [shape = 'u32[144,128]{1,0:T(1,128)}', space=vmem, size = 0x12000, scoped, tag = 'internal scratch']
  %s0 = inlined_call_operand.vmem [shape: f32[8,32], index: 0, kind: input, shape index: {}]
  %s1 = inlined_call_operand.hbm [shape: f32[32,128], index: 1, kind: input, shape index: {}]
  %s2 = inlined_call_operand.vmem [shape: f32[1,128], index: 2, kind: input, shape index: {}]
  %s3 = inlined_call_operand.hbm [shape: f32[128,128], index: 3, kind: input, shape index: {}]
  %s4 = inlined_call_operand.vmem [shape: f32[1,128], index: 4, kind: input, shape index: {}]
  %s5 = inlined_call_operand.hbm [shape: f32[8,128], index: 5, kind: output, shape index: {}]
  %s6 = sld [smem:[#allocation0]]
  $region38: #{_mlp_forward.1} parent=0
    _
  %s8 = ssub.s32 1, %s6
  %s9 = scalar_select 0, %s8, %s6
  $region1: #{_mlp_forward.1} parent=0
    #allocation2 [shape = 'u8[16384]{0}', space=vmem, size = 0x4000, scoped, tag = 'input window, operand 1, single buffered']
    #allocation3 [shape = 's32[1]{0}', space=sflag, size = 0x4, scoped, tag = 'scoped memory for _mlp_forward.1']
    #allocation4 [shape = 's32[1]{0}', space=sflag, size = 0x4, scoped, tag = 'scoped memory for _mlp_forward.1']
    #allocation5 [shape = 'u8[65536]{0}', space=vmem, size = 0x10000, scoped, tag = 'input window, operand 3, single buffered']
    #allocation6 [shape = 's32[1]{0}', space=sflag, size = 0x4, scoped, tag = 'scoped memory for _mlp_forward.1']
    #allocation7 [shape = 'u8[4096]{0}', space=vmem, size = 0x1000, scoped, tag = 'output window, operand 0, single buffered']
    %10 = vsyncpa [#allocation3], 0
    %11 = vsyncpa [#allocation6], 0
    %12 = vsyncpa [#allocation4], 0
    // Predicated region
    $region2: #{_mlp_forward.1} parent=1 // pred_check
      _
    $region3: #{_mlp_forward.1} parent=1 // pred_check_branch
      %14 = sbr.rel (0) target = $region5
    $region4: #{_mlp_forward.1} parent=1 // pred_region
      _
    $region5: #{_mlp_forward.1} parent=1 // pred_fallthru
      _
    // Predicated region
    $region6: #{_mlp_forward.1} parent=1 // pred_check
      _
    $region7: #{_mlp_forward.1} parent=1 // pred_check_branch
      %16 = sbr.rel (0) target = $region9
    $region8: #{_mlp_forward.1} parent=1 // pred_region
      %s18 = ssub.s32 512, 512
      %19 = vsyncadd [#allocation3], %s18
      %s20 = sshll.u32 [#allocation2], 4
      %s21 = int_to_ptr.vmem [resolvable:$true] %s20
      %26 = dma.hbm_to_vmem [thread:$0]  %s1, 512, %s21, [#allocation3], 128, 128, 8
    $region9: #{_mlp_forward.1} parent=1 // pred_fallthru
      _
    // Predicated region
    $region10: #{_mlp_forward.1} parent=1 // pred_check
      _
    $region11: #{_mlp_forward.1} parent=1 // pred_check_branch
      %28 = sbr.rel (0) target = $region13
    $region12: #{_mlp_forward.1} parent=1 // pred_region
      _
    $region13: #{_mlp_forward.1} parent=1 // pred_fallthru
      _
    // Predicated region
    $region14: #{_mlp_forward.1} parent=1 // pred_check
      _
    $region15: #{_mlp_forward.1} parent=1 // pred_check_branch
      %30 = sbr.rel (0) target = $region17
    $region16: #{_mlp_forward.1} parent=1 // pred_region
      %s32 = ssub.s32 2048, 2048
      %33 = vsyncadd [#allocation6], %s32
      %s34 = sshll.u32 [#allocation5], 4
      %s35 = int_to_ptr.vmem [resolvable:$true] %s34
      %40 = dma.hbm_to_vmem [thread:$0]  %s3, 2048, %s35, [#allocation6], 128, 128, 8
    $region17: #{_mlp_forward.1} parent=1 // pred_fallthru
      _
    // Predicated region
    $region18: #{_mlp_forward.1} parent=1 // pred_check
      _
    $region19: #{_mlp_forward.1} parent=1 // pred_check_branch
      %42 = sbr.rel (0) target = $region21
    $region20: #{_mlp_forward.1} parent=1 // pred_region
      _
    $region21: #{_mlp_forward.1} parent=1 // pred_fallthru
      _
    // Predicated region
    $region22: #{_mlp_forward.1} parent=1 // pred_check
      _
    $region23: #{_mlp_forward.1} parent=1 // pred_check_branch
      %44 = sbr.rel (0) target = $region25
    $region24: #{_mlp_forward.1} parent=1 // pred_region
      %45 = dma.done [#allocation3], 512
    $region25: #{_mlp_forward.1} parent=1 // pred_fallthru
      _
    // Predicated region
    $region26: #{_mlp_forward.1} parent=1 // pred_check
      _
    $region27: #{_mlp_forward.1} parent=1 // pred_check_branch
      %47 = sbr.rel (0) target = $region29
    $region28: #{_mlp_forward.1} parent=1 // pred_region
      %48 = dma.done [#allocation6], 2048
    $region29: #{_mlp_forward.1} parent=1 // pred_fallthru
      _
    %v49 = vld [vmem:[%s0] sm:$0xff]
    %v50 = vld [vmem:[#allocation2] sm:$0xff]
    %v51 = vld [vmem:[#allocation2 + $0x8] sm:$0xff]
    %v52 = vld [vmem:[#allocation2 + $0x10] sm:$0xff]
    %v53 = vld [vmem:[#allocation2 + $0x18] sm:$0xff]
    %v54 = vld [vmem:[%s2] sm:$0x1]
    %v56 = vlaneseq
    %v57 = vshrl.u32 %v56, 7
    %v58 = vsub.s32 0, %v57
    %v59 = vrot.slane %v54, %v58
    %vm61 = vcmask 261120
    %v63 = vsel %vm61, %v49, 0
    %65 = vmatprep.subr.mxu0 0.0
    %66 = vmatpush1.msra.mxu0 %v50
    %67 = vmatprep.subr.mxu0 0.0
    %68 = vmatpush1.msra.mxu0 %v51
    %69 = vmatprep.subr.mxu0 0.0
    %70 = vmatpush1.msra.mxu0 %v52
    %71 = vmatprep.subr.mxu0 0.0
    %72 = vmatpush1.msra.mxu0 %v53
    %73 = vmatprep.subr.mxu0 0.0
    %74 = vmatpush1.msra.mxu0 0.0
    %75 = vmatprep.subr.mxu0 0.0
    %76 = vmatpush1.msra.mxu0 0.0
    %77 = vmatprep.subr.mxu0 0.0
    %78 = vmatpush1.msra.mxu0 0.0
    %79 = vmatprep.subr.mxu0 0.0
    %80 = vmatpush1.msra.mxu0 0.0
    %81 = vmatprep.subr.mxu0 0.0
    %82 = vmatpush1.msra.mxu0 0.0
    %83 = vmatprep.subr.mxu0 0.0
    %84 = vmatpush1.msra.mxu0 0.0
    %85 = vmatprep.subr.mxu0 0.0
    %86 = vmatpush1.msra.mxu0 0.0
    %87 = vmatprep.subr.mxu0 0.0
    %88 = vmatpush1.msra.mxu0 0.0
    %89 = vmatprep.subr.mxu0 0.0
    %90 = vmatpush1.msra.mxu0 0.0
    %91 = vmatprep.subr.mxu0 0.0
    %92 = vmatpush1.msra.mxu0 0.0
    %93 = vmatprep.subr.mxu0 0.0
    %94 = vmatpush1.msra.mxu0 0.0
    %95 = vmatprep.subr.mxu0 0.0
    %96 = vmatpush1.msra.mxu0 0.0
    %97 = vmatprep.subr.mxu0 0.0
    %98 = vmatpush1.msra.mxu0 0.0
    %99 = vmatprep.subr.mxu0 0.0
    %100 = vmatpush1.msra.mxu0 0.0
    %101 = vmatprep.subr.mxu0 0.0
    %102 = vmatpush1.msra.mxu0 0.0
    %103 = vmatprep.subr.mxu0 0.0
    %104 = vmatpush1.msra.mxu0 0.0
    %105 = vmatprep.subr.mxu0 0.0
    %106 = vmatpush1.msra.mxu0 0.0
    %107 = vmatprep.subr.mxu0 0.0
    %108 = vmatpush1.msra.mxu0 0.0
    %109 = vmatprep.subr.mxu0 0.0
    %110 = vmatpush1.msra.mxu0 0.0
    %111 = vmatprep.subr.mxu0 0.0
    %112 = vmatpush1.msra.mxu0 0.0
    %113 = vmatprep.subr.mxu0 0.0
    %114 = vmatpush1.msra.mxu0 0.0
    %115 = vmatprep.subr.mxu0 0.0
    %116 = vmatpush1.msra.mxu0 0.0
    %117 = vmatprep.subr.mxu0 0.0
    %118 = vmatpush1.msra.mxu0 0.0
    %119 = vmatprep.subr.mxu0 0.0
    %120 = vmatpush1.msra.mxu0 0.0
    %121 = vmatprep.subr.mxu0 0.0
    %122 = vmatpush1.msra.mxu0 0.0
    %123 = vmatprep.subr.mxu0 0.0
    %124 = vmatpush1.msra.mxu0 0.0
    %125 = vmatprep.subr.mxu0 0.0
    %126 = vmatpush1.msra.mxu0 0.0
    %127 = vmatprep.subr.mxu0 0.0
    %128 = vmatpush1.msra.mxu0 0.0
    %129 = vmatprep.mubr.f32.mxu0 0.0
    %130 = vmatmul.mubr.f32.gmra.mrb[0].mxu0 %v63
    %v131 = vpop.f32.mrb[0].mxu0
    %v132 = vadd.f32 %v59, %v131
    %v133 = vpop.f32.mrb[0].mxu0
    %134 = vdwg.mxu0
    %v135 = vmax.f32 %v132, 0.0
    %v136 = vld [vmem:[#allocation5] sm:$0xff]
    %v137 = vld [vmem:[#allocation5 + $0x8] sm:$0xff]
    %v138 = vld [vmem:[#allocation5 + $0x10] sm:$0xff]
    %v139 = vld [vmem:[#allocation5 + $0x18] sm:$0xff]
    %v140 = vld [vmem:[#allocation5 + $0x20] sm:$0xff]
    %v141 = vld [vmem:[#allocation5 + $0x28] sm:$0xff]
    %v142 = vld [vmem:[#allocation5 + $0x30] sm:$0xff]
    %v143 = vld [vmem:[#allocation5 + $0x38] sm:$0xff]
    %v144 = vld [vmem:[#allocation5 + $0x40] sm:$0xff]
    %v145 = vld [vmem:[#allocation5 + $0x48] sm:$0xff]
    %v146 = vld [vmem:[#allocation5 + $0x50] sm:$0xff]
    %v147 = vld [vmem:[#allocation5 + $0x58] sm:$0xff]
    %v148 = vld [vmem:[#allocation5 + $0x60] sm:$0xff]
    %v149 = vld [vmem:[#allocation5 + $0x68] sm:$0xff]
    %v150 = vld [vmem:[#allocation5 + $0x70] sm:$0xff]
    %v151 = vld [vmem:[#allocation5 + $0x78] sm:$0xff]
    %v152 = vld [vmem:[%s4] sm:$0x1]
    %v154 = vlaneseq
    %v155 = vshrl.u32 %v154, 7
    %v156 = vsub.s32 0, %v155
    %v157 = vrot.slane %v152, %v156
    %159 = vmatprep.subr.mxu0 0.0
    %160 = vmatpush1.msra.mxu0 %v136
    %161 = vmatprep.subr.mxu0 0.0
    %162 = vmatpush1.msra.mxu0 %v137
    %163 = vmatprep.subr.mxu0 0.0
    %164 = vmatpush1.msra.mxu0 %v138
    %165 = vmatprep.subr.mxu0 0.0
    %166 = vmatpush1.msra.mxu0 %v139
    %167 = vmatprep.subr.mxu0 0.0
    %168 = vmatpush1.msra.mxu0 %v140
    %169 = vmatprep.subr.mxu0 0.0
    %170 = vmatpush1.msra.mxu0 %v141
    %171 = vmatprep.subr.mxu0 0.0
    %172 = vmatpush1.msra.mxu0 %v142
    %173 = vmatprep.subr.mxu0 0.0
    %174 = vmatpush1.msra.mxu0 %v143
    %175 = vmatprep.subr.mxu0 0.0
    %176 = vmatpush1.msra.mxu0 %v144
    %177 = vmatprep.subr.mxu0 0.0
    %178 = vmatpush1.msra.mxu0 %v145
    %179 = vmatprep.subr.mxu0 0.0
    %180 = vmatpush1.msra.mxu0 %v146
    %181 = vmatprep.subr.mxu0 0.0
    %182 = vmatpush1.msra.mxu0 %v147
    %183 = vmatprep.subr.mxu0 0.0
    %184 = vmatpush1.msra.mxu0 %v148
    %185 = vmatprep.subr.mxu0 0.0
    %186 = vmatpush1.msra.mxu0 %v149
    %187 = vmatprep.subr.mxu0 0.0
    %188 = vmatpush1.msra.mxu0 %v150
    %189 = vmatprep.subr.mxu0 0.0
    %190 = vmatpush1.msra.mxu0 %v151
    %191 = vmatprep.subr.mxu0 0.0
    %192 = vmatpush1.msra.mxu0 0.0
    %193 = vmatprep.subr.mxu0 0.0
    %194 = vmatpush1.msra.mxu0 0.0
    %195 = vmatprep.subr.mxu0 0.0
    %196 = vmatpush1.msra.mxu0 0.0
    %197 = vmatprep.subr.mxu0 0.0
    %198 = vmatpush1.msra.mxu0 0.0
    %199 = vmatprep.subr.mxu0 0.0
    %200 = vmatpush1.msra.mxu0 0.0
    %201 = vmatprep.subr.mxu0 0.0
    %202 = vmatpush1.msra.mxu0 0.0
    %203 = vmatprep.subr.mxu0 0.0
    %204 = vmatpush1.msra.mxu0 0.0
    %205 = vmatprep.subr.mxu0 0.0
    %206 = vmatpush1.msra.mxu0 0.0
    %207 = vmatprep.subr.mxu0 0.0
    %208 = vmatpush1.msra.mxu0 0.0
    %209 = vmatprep.subr.mxu0 0.0
    %210 = vmatpush1.msra.mxu0 0.0
    %211 = vmatprep.subr.mxu0 0.0
    %212 = vmatpush1.msra.mxu0 0.0
    %213 = vmatprep.subr.mxu0 0.0
    %214 = vmatpush1.msra.mxu0 0.0
    %215 = vmatprep.subr.mxu0 0.0
    %216 = vmatpush1.msra.mxu0 0.0
    %217 = vmatprep.subr.mxu0 0.0
    %218 = vmatpush1.msra.mxu0 0.0
    %219 = vmatprep.subr.mxu0 0.0
    %220 = vmatpush1.msra.mxu0 0.0
    %221 = vmatprep.subr.mxu0 0.0
    %222 = vmatpush1.msra.mxu0 0.0
    %223 = vmatprep.mubr.f32.mxu0 0.0
    %224 = vmatmul.mubr.f32.gmra.mrb[0].mxu0 %v135
    %v225 = vpop.f32.mrb[0].mxu0
    %v226 = vadd.f32 %v157, %v225
    %v227 = vpop.f32.mrb[0].mxu0
    %228 = vdwg.mxu0
    %v229 = vmax.f32 %v226, 0.0
    %230 = vst [vmem:[#allocation7] sm:$0xff] %v229
    // Predicated region
    $region30: #{_mlp_forward.1} parent=1 // pred_check
      _
    $region31: #{_mlp_forward.1} parent=1 // pred_check_branch
      %232 = sbr.rel (0) target = $region33
    $region32: #{_mlp_forward.1} parent=1 // pred_region
      %s234 = ssub.s32 128, 128
      %235 = vsyncadd [#allocation4], %s234
      %s237 = sshll.u32 [#allocation7], 4
      %s238 = int_to_ptr.vmem [resolvable:$true] %s237
      %240 = dma.vmem_to_hbm [thread:$0]  %s238, 128, %s5, [#allocation4]
    $region33: #{_mlp_forward.1} parent=1 // pred_fallthru
      _
    // Predicated region
    $region34: #{_mlp_forward.1} parent=1 // pred_check
      _
    $region35: #{_mlp_forward.1} parent=1 // pred_check_branch
      %242 = sbr.rel (0) target = $region37
    $region36: #{_mlp_forward.1} parent=1 // pred_region
      %243 = dma.done [#allocation4], 128
    $region37: #{_mlp_forward.1} parent=1 // pred_fallthru
      _
    %244 = vsyncpa [#allocation3], 1
    %245 = vsyncpa [#allocation6], 1
    %246 = vsyncpa [#allocation4], 1

</llo_original>
